<compile_context>
chip_gen: v7x
topology: tpu7x:2x2x1
jax: 0.10.0
libtpu: 0.0.40
codegen_flags: <defaults>
</compile_context>

<pallas_src>
import functools

import jax
import jax.numpy as jnp
from jax.experimental import pallas as pl
from jax.experimental.pallas import tpu as pltpu

EPS = 1e-5  # nn.LayerNorm default


def _round_up(x, m):
    return (x + m - 1) // m * m


# ---------------------------------------------------------------------------
# Pallas kernel: composed matmul + residual + LayerNorm for one batch tile.
# ---------------------------------------------------------------------------
def fusion_kernel(img_ref, txt_ref, w_ref, p_ref, out_ref, *, e_actual):
    img = img_ref[...]
    if img.dtype != jnp.float32:
        img = img.astype(jnp.float32)
    txt = txt_ref[...]
    if txt.dtype != w_ref.dtype:
        txt = txt.astype(w_ref.dtype)

    bias = p_ref[0:1, :]    # (1, Ep) folded bias
    gamma = p_ref[1:2, :]   # (1, Ep) LayerNorm weight
    beta = p_ref[2:3, :]    # (1, Ep) LayerNorm bias

    # Single composed linear == self_attn(out_proj . v_proj) followed by
    # cross_attn(out_proj . v_proj); exact for seq_len == 1.
    fused = jnp.dot(txt, w_ref[...],
                    preferred_element_type=jnp.float32) + bias

    # Residual + LayerNorm over the (real) embed dim, all in f32.
    y = fused + img
    ep = y.shape[-1]
    inv_e = jnp.float32(1.0 / e_actual)
    mu = jnp.sum(y, axis=-1, keepdims=True) * inv_e
    d = y - mu
    if e_actual != ep:
        # Padded lanes of y are exactly 0 (zero-padded inputs / weight columns
        # / bias), so the mean is already correct; only the variance needs the
        # lane mask (d = -mu there).
        lane = jax.lax.broadcasted_iota(jnp.int32, y.shape, 1)
        d_sq = jnp.where(lane < e_actual, d, 0.0)
    else:
        d_sq = d
    var = jnp.sum(d_sq * d_sq, axis=-1, keepdims=True) * inv_e
    normed = d * jax.lax.rsqrt(var + EPS)
    # Padded output lanes land on gamma=0, beta=0 -> 0; sliced off outside.
    out_ref[...] = (normed * gamma + beta).astype(out_ref.dtype)


# ---------------------------------------------------------------------------
# One-time parameter folding / padding (NOT on the per-call path).
# ---------------------------------------------------------------------------
def prepare_params(params, matmul_dtype=jnp.float32):
    """Fold the 4 chained linears into one (E, E) weight (pre-transposed to
    (in, out)) + bias, pack bias/gamma/beta into one sublane-aligned block,
    and pad everything to a lane-dense embed dim (multiple of 128).
    Set matmul_dtype=jnp.bfloat16 to run the MXU in bf16 with f32 accumulation.
    """
    (in_w_s, in_b_s, out_w_s, out_b_s,
     in_w_c, in_b_c, out_w_c, out_b_c, gamma, beta) = params
    E = gamma.shape[0]

    wv_s = in_w_s[2 * E:].T.astype(jnp.float32)   # value-proj rows only
    wo_s = out_w_s.T.astype(jnp.float32)
    wv_c = in_w_c[2 * E:].T.astype(jnp.float32)
    wo_c = out_w_c.T.astype(jnp.float32)

    # x -> ((x @ wv_s + bv_s) @ wo_s + bo_s) -> (.. @ wv_c + bv_c) @ wo_c + bo_c
    w = wv_s @ wo_s @ wv_c @ wo_c
    b = ((in_b_s[2 * E:] @ wo_s + out_b_s) @ wv_c + in_b_c[2 * E:]) @ wo_c + out_b_c

    Ep = _round_up(max(E, 128), 128)
    w_p = jnp.zeros((Ep, Ep), matmul_dtype).at[:E, :E].set(w.astype(matmul_dtype))
    # Row 0: folded bias, row 1: gamma, row 2: beta, rows 3..7: zero pad so the
    # block is a clean (8, Ep) sublane-aligned VMEM tile.
    p_p = jnp.zeros((8, Ep), jnp.float32)
    p_p = p_p.at[0, :E].set(b.astype(jnp.float32))
    p_p = p_p.at[1, :E].set(gamma.astype(jnp.float32))
    p_p = p_p.at[2, :E].set(beta.astype(jnp.float32))
    return {"w": w_p, "p": p_p, "E": E, "Ep": Ep}


# ---------------------------------------------------------------------------
# Wrapper: batch-grid pallas_call with resident weight / param block.
# ---------------------------------------------------------------------------
def cross_attention_fusion(img_feat, txt_feat, prepared, *, block_b=None):
    w, p = prepared["w"], prepared["p"]
    E, Ep = prepared["E"], prepared["Ep"]
    B = img_feat.shape[0]

    if block_b is None:
        # 512-row f32 tiles keep double-buffered activations well inside
        # v7x's 64 MiB VMEM; v5e/v6e (128 MiB) have extra headroom.
        block_b = min(_round_up(B, 8), 512)
    Bp = _round_up(B, block_b)

    def pad(x):
        if B == Bp and E == Ep:
            return x
        return jnp.zeros((Bp, Ep), x.dtype).at[:B, :E].set(x)

    img_p = pad(img_feat)
    txt_p = pad(txt_feat)

    act_spec = pl.BlockSpec((block_b, Ep), lambda i: (i, 0))
    w_spec = pl.BlockSpec((Ep, Ep), lambda i: (0, 0))
    p_spec = pl.BlockSpec((8, Ep), lambda i: (0, 0))

    # Explicit scoped-VMEM budget (v5e default is only 16 MiB): resident weight
    # + param block (double-buffered by pipelining) + 3 double-buffered
    # activation tiles, plus ~50% headroom, clamped to [16, 64] MiB.
    w_bytes = 2 * Ep * Ep * jnp.dtype(w.dtype).itemsize
    p_bytes = 2 * 8 * Ep * 4
    act_bytes = 3 * 2 * block_b * Ep * 4          # img, txt, out
    vmem_limit = int(min(max(int(1.5 * (w_bytes + p_bytes + act_bytes)),
                             16 * 1024 * 1024),
                         64 * 1024 * 1024))

    out_p = pl.pallas_call(
        functools.partial(fusion_kernel, e_actual=E),
        out_shape=jax.ShapeDtypeStruct((Bp, Ep), img_feat.dtype),
        grid=(Bp // block_b,),
        in_specs=[act_spec, act_spec, w_spec, p_spec],
        out_specs=act_spec,
        compiler_params=pltpu.CompilerParams(
            dimension_semantics=("parallel",),
            vmem_limit_bytes=vmem_limit),
    )(img_p, txt_p, w, p)

    if B == Bp and E == Ep:
        return out_p
    return out_p[:B, :E]


# ---------------------------------------------------------------------------
# Deterministic parameter init (shapes from nn.MultiheadAttention / LayerNorm)
# ---------------------------------------------------------------------------
def init_params(key, embed_dim):
    ks = jax.random.split(key, 6)
    s = 1.0 / jnp.sqrt(jnp.float32(embed_dim))
    u = lambda k, shape: jax.random.uniform(k, shape, jnp.float32, -s, s)
    in_w_s = u(ks[0], (3 * embed_dim, embed_dim))
    in_b_s = u(ks[1], (3 * embed_dim,))
    out_w_s = u(ks[2], (embed_dim, embed_dim))
    out_b_s = jnp.zeros((embed_dim,), jnp.float32)
    in_w_c = u(ks[3], (3 * embed_dim, embed_dim))
    in_b_c = u(ks[4], (3 * embed_dim,))
    out_w_c = u(ks[5], (embed_dim, embed_dim))
    out_b_c = jnp.zeros((embed_dim,), jnp.float32)
    gamma = jnp.ones((embed_dim,), jnp.float32)
    beta = jnp.zeros((embed_dim,), jnp.float32)
    return (in_w_s, in_b_s, out_w_s, out_b_s,
            in_w_c, in_b_c, out_w_c, out_b_c, gamma, beta)


# ---------------------------------------------------------------------------
# Pure-JAX reference (full MHA math incl. q/k/softmax) for validation
# ---------------------------------------------------------------------------
def _mha_ref(x_q, x_kv, in_w, in_b, out_w, out_b, num_heads):
    E = x_q.shape[-1]
    q = x_q @ in_w[:E].T + in_b[:E]
    k = x_kv @ in_w[E:2 * E].T + in_b[E:2 * E]
    v = x_kv @ in_w[2 * E:].T + in_b[2 * E:]
    B, S, _ = q.shape
    dh = E // num_heads
    qh = q.reshape(B, S, num_heads, dh).transpose(0, 2, 1, 3)
    kh = k.reshape(B, -1, num_heads, dh).transpose(0, 2, 1, 3)
    vh = v.reshape(B, -1, num_heads, dh).transpose(0, 2, 1, 3)
    scores = (qh @ jnp.swapaxes(kh, -1, -2)) / jnp.sqrt(jnp.float32(dh))
    wts = jax.nn.softmax(scores, axis=-1)
    o = (wts @ vh).transpose(0, 2, 1, 3).reshape(B, S, E)
    return o @ out_w.T + out_b


def reference_forward(img_feat, txt_feat, params, num_heads):
    (in_w_s, in_b_s, out_w_s, out_b_s,
     in_w_c, in_b_c, out_w_c, out_b_c, gamma, beta) = params
    img = img_feat[:, None, :]
    txt = txt_feat[:, None, :]
    txt_attn = _mha_ref(txt, txt, in_w_s, in_b_s, out_w_s, out_b_s, num_heads)
    fused = _mha_ref(img, txt_attn, in_w_c, in_b_c, out_w_c, out_b_c, num_heads)
    y = fused + img
    mu = jnp.mean(y, axis=-1, keepdims=True)
    var = jnp.mean((y - mu) ** 2, axis=-1, keepdims=True)
    out = (y - mu) / jnp.sqrt(var + EPS) * gamma + beta
    return out[:, 0, :]


if __name__ == "__main__":
    B, E, H = 8, 32, 4
    key = jax.random.PRNGKey(0)
    k_img, k_txt, k_par = jax.random.split(key, 3)
    img_feat = jax.random.normal(k_img, (B, E), jnp.float32)
    txt_feat = jax.random.normal(k_txt, (B, E), jnp.float32)
    params = init_params(k_par, E)

    # One-time weight folding / padding (kept off the per-call path).
    prepared = prepare_params(params, matmul_dtype=jnp.float32)

    out = cross_attention_fusion(img_feat, txt_feat, prepared)
    out = jax.block_until_ready(out)

    ref = reference_forward(img_feat, txt_feat, params, H)
    assert out.shape == (B, E)
    assert jnp.allclose(out, ref, atol=1e-4, rtol=1e-4), (
        f"max err {jnp.max(jnp.abs(out - ref))}")
    print("KERNEL_OK")
</pallas_src>

<mosaic_0001>
module attributes {stable_mosaic.version = 11 : i64} {
  func.func @fusion_kernel(%arg0: i32, %arg1: memref<8x128xf32, #tpu.memory_space<vmem>>, %arg2: memref<8x128xf32, #tpu.memory_space<vmem>>, %arg3: memref<128x128xf32, #tpu.memory_space<vmem>>, %arg4: memref<8x128xf32, #tpu.memory_space<vmem>>, %arg5: memref<8x128xf32, #tpu.memory_space<vmem>>) attributes {dimension_semantics = [#tpu.dimension_semantics<parallel>], iteration_bounds = array<i64: 1>, scalar_prefetch = 0 : i64, scratch_operands = 0 : i64, tpu.core_type = #tpu.core_type<tc>, window_params = [{transform_indices = @transform_0, window_bounds = array<i64: 8, 128>}, {transform_indices = @transform_1, window_bounds = array<i64: 8, 128>}, {pipeline_mode = #tpu.pipeline_mode<synchronous>, transform_indices = @transform_2, window_bounds = array<i64: 128, 128>}, {pipeline_mode = #tpu.pipeline_mode<synchronous>, transform_indices = @transform_3, window_bounds = array<i64: 8, 128>}, {transform_indices = @transform_4, window_bounds = array<i64: 8, 128>}]} {
    %c0 = arith.constant 0 : index
    %c0_0 = arith.constant 0 : index
    %0 = vector.load %arg1[%c0, %c0_0] : memref<8x128xf32, #tpu.memory_space<vmem>>, vector<8x128xf32>
    %c0_1 = arith.constant 0 : index
    %c0_2 = arith.constant 0 : index
    %1 = vector.load %arg2[%c0_1, %c0_2] : memref<8x128xf32, #tpu.memory_space<vmem>>, vector<8x128xf32>
    %c0_3 = arith.constant 0 : index
    %c0_4 = arith.constant 0 : index
    %2 = vector.load %arg4[%c0_3, %c0_4] : memref<8x128xf32, #tpu.memory_space<vmem>>, vector<1x128xf32>
    %c1 = arith.constant 1 : index
    %c0_5 = arith.constant 0 : index
    %3 = vector.load %arg4[%c1, %c0_5] : memref<8x128xf32, #tpu.memory_space<vmem>>, vector<1x128xf32>
    %c2 = arith.constant 2 : index
    %c0_6 = arith.constant 0 : index
    %4 = vector.load %arg4[%c2, %c0_6] : memref<8x128xf32, #tpu.memory_space<vmem>>, vector<1x128xf32>
    %c0_7 = arith.constant 0 : index
    %c0_8 = arith.constant 0 : index
    %5 = vector.load %arg3[%c0_7, %c0_8] : memref<128x128xf32, #tpu.memory_space<vmem>>, vector<128x128xf32>
    %cst = arith.constant dense<0.000000e+00> : vector<8x128xf32>
    %6 = tpu.matmul %1, %5, %cst {dimension_numbers = #tpu.dot_dimension_numbers<[1], [0], [0], [1], [0, 0, 1, 1], [], []>} : vector<8x128xf32>, vector<128x128xf32>, vector<8x128xf32> -> vector<8x128xf32>
    %7 = vector.broadcast %2 : vector<1x128xf32> to vector<8x128xf32>
    %8 = arith.addf %6, %7 : vector<8x128xf32>
    %9 = arith.addf %8, %0 : vector<8x128xf32>
    %cst_9 = arith.constant dense<0.000000e+00> : vector<8xf32>
    %10 = vector.multi_reduction <add>, %9, %cst_9 [1] : vector<8x128xf32> to vector<8xf32>
    %11 = vector.shape_cast %10 : vector<8xf32> to vector<8x1xf32>
    %cst_10 = arith.constant 3.125000e-02 : f32
    %12 = vector.broadcast %cst_10 : f32 to vector<8x1xf32>
    %13 = arith.mulf %11, %12 : vector<8x1xf32>
    %14 = vector.broadcast %13 : vector<8x1xf32> to vector<8x128xf32>
    %15 = arith.subf %9, %14 : vector<8x128xf32>
    %16 = tpu.iota {dimensions = array<i32: 1>} : vector<8x128xi32>
    %c32_i32 = arith.constant 32 : i32
    %17 = vector.broadcast %c32_i32 : i32 to vector<8x128xi32>
    %18 = arith.cmpi slt, %16, %17 : vector<8x128xi32>
    %cst_11 = arith.constant 0.000000e+00 : f32
    %19 = vector.broadcast %cst_11 : f32 to vector<8x128xf32>
    %20 = arith.select %18, %15, %19 : vector<8x128xi1>, vector<8x128xf32>
    %21 = arith.mulf %20, %20 : vector<8x128xf32>
    %cst_12 = arith.constant dense<0.000000e+00> : vector<8xf32>
    %22 = vector.multi_reduction <add>, %21, %cst_12 [1] : vector<8x128xf32> to vector<8xf32>
    %23 = vector.shape_cast %22 : vector<8xf32> to vector<8x1xf32>
    %cst_13 = arith.constant 3.125000e-02 : f32
    %24 = vector.broadcast %cst_13 : f32 to vector<8x1xf32>
    %25 = arith.mulf %23, %24 : vector<8x1xf32>
    %cst_14 = arith.constant 9.99999974E-6 : f32
    %26 = vector.broadcast %cst_14 : f32 to vector<8x1xf32>
    %27 = arith.addf %25, %26 : vector<8x1xf32>
    %28 = math.rsqrt %27 : vector<8x1xf32>
    %29 = vector.broadcast %28 : vector<8x1xf32> to vector<8x128xf32>
    %30 = arith.mulf %15, %29 : vector<8x128xf32>
    %31 = vector.broadcast %3 : vector<1x128xf32> to vector<8x128xf32>
    %32 = arith.mulf %30, %31 : vector<8x128xf32>
    %33 = vector.broadcast %4 : vector<1x128xf32> to vector<8x128xf32>
    %34 = arith.addf %32, %33 : vector<8x128xf32>
    %c0_15 = arith.constant 0 : index
    %c0_16 = arith.constant 0 : index
    %35 = vector.load %arg5[%c0_15, %c0_16] : memref<8x128xf32, #tpu.memory_space<vmem>>, vector<8x128xf32>
    tpu.vector_store %arg5[%c0_15, %c0_16], %34 {strides = array<i32>} : memref<8x128xf32, #tpu.memory_space<vmem>>, vector<8x128xf32>,
    return
  }
  func.func @transform_0(%arg0: i32) -> (i32, i32) {
    %c0_i32 = arith.constant 0 : i32
    %c0_i32_0 = arith.constant 0 : i32
    return %arg0, %c0_i32 : i32, i32
  }
  func.func @transform_1(%arg0: i32) -> (i32, i32) {
    %c0_i32 = arith.constant 0 : i32
    %c0_i32_0 = arith.constant 0 : i32
    return %arg0, %c0_i32 : i32, i32
  }
  func.func @transform_2(%arg0: i32) -> (i32, i32) {
    %c0_i32 = arith.constant 0 : i32
    %c0_i32_0 = arith.constant 0 : i32
    %c0_i32_1 = arith.constant 0 : i32
    return %c0_i32, %c0_i32_0 : i32, i32
  }
  func.func @transform_3(%arg0: i32) -> (i32, i32) {
    %c0_i32 = arith.constant 0 : i32
    %c0_i32_0 = arith.constant 0 : i32
    %c0_i32_1 = arith.constant 0 : i32
    return %c0_i32, %c0_i32_0 : i32, i32
  }
  func.func @transform_4(%arg0: i32) -> (i32, i32) {
    %c0_i32 = arith.constant 0 : i32
    %c0_i32_0 = arith.constant 0 : i32
    return %arg0, %c0_i32 : i32, i32
  }
}

</mosaic_0001>

<llo_original>
// kernel: tpu_custom_call.1
$region0: #{tpu_custom_call.1}
  #allocation0 [shape = 'u32[]', space=smem, size = 0x4, offset = 0x4, fixed_abs, tag = 'smem constant byte address 0x4 - core index']
  #allocation1 [shape = 'u32[144,128]{1,0:T(1,128)}', space=vmem, size = 0x12000, scoped, tag = 'internal scratch']
  %s0 = inlined_call_operand.hbm [shape: f32[8,128], index: 0, kind: input, shape index: {}]
  %s1 = inlined_call_operand.hbm [shape: f32[8,128], index: 1, kind: input, shape index: {}]
  %s2 = inlined_call_operand.hbm [shape: f32[128,128], index: 2, kind: input, shape index: {}]
  %s3 = inlined_call_operand.vmem [shape: f32[8,128], index: 3, kind: input, shape index: {}]
  %s4 = inlined_call_operand.hbm [shape: f32[8,128], index: 4, kind: output, shape index: {}]
  %s5 = sld [smem:[#allocation0]]
  $region38: #{tpu_custom_call.1} parent=0
    _
  %s7 = ssub.s32 1, %s5
  %s8 = scalar_select 0, %s7, %s5
  $region1: #{tpu_custom_call.1} parent=0
    #allocation2 [shape = 'u8[4096]{0}', space=vmem, size = 0x1000, scoped, tag = 'input window, operand 0, single buffered']
    #allocation3 [shape = 's32[1]{0}', space=sflag, size = 0x4, scoped, tag = 'scoped memory for tpu_custom_call.1']
    #allocation4 [shape = 's32[1]{0}', space=sflag, size = 0x4, scoped, tag = 'scoped memory for tpu_custom_call.1']
    #allocation5 [shape = 'u8[4096]{0}', space=vmem, size = 0x1000, scoped, tag = 'input window, operand 1, single buffered']
    #allocation6 [shape = 's32[1]{0}', space=sflag, size = 0x4, scoped, tag = 'scoped memory for tpu_custom_call.1']
    #allocation7 [shape = 'u8[65536]{0}', space=vmem, size = 0x10000, scoped, tag = 'input window, operand 2, single buffered']
    #allocation8 [shape = 'u8[4096]{0}', space=vmem, size = 0x1000, scoped, tag = 'output window, operand 0, single buffered']
    %9 = vsyncpa [#allocation3], 0
    %10 = vsyncpa [#allocation6], 0
    %11 = vsyncpa [#allocation4], 0
    // Predicated region
    $region2: #{tpu_custom_call.1} parent=1 // pred_check
      _
    $region3: #{tpu_custom_call.1} parent=1 // pred_check_branch
      %13 = sbr.rel (0) target = $region5
    $region4: #{tpu_custom_call.1} parent=1 // pred_region
      %s15 = ssub.s32 128, 128
      %16 = vsyncadd [#allocation3], %s15
      %s18 = sshll.u32 [#allocation2], 4
      %s19 = int_to_ptr.vmem [resolvable:$true] %s18
      %21 = dma.hbm_to_vmem [thread:$0]  %s0, 128, %s19, [#allocation3]
    $region5: #{tpu_custom_call.1} parent=1 // pred_fallthru
      _
    // Predicated region
    $region6: #{tpu_custom_call.1} parent=1 // pred_check
      _
    $region7: #{tpu_custom_call.1} parent=1 // pred_check_branch
      %23 = sbr.rel (0) target = $region9
    $region8: #{tpu_custom_call.1} parent=1 // pred_region
      %s25 = ssub.s32 128, 128
      %26 = vsyncadd [#allocation6], %s25
      %s28 = sshll.u32 [#allocation5], 4
      %s29 = int_to_ptr.vmem [resolvable:$true] %s28
      %31 = dma.hbm_to_vmem [thread:$0]  %s1, 128, %s29, [#allocation6]
    $region9: #{tpu_custom_call.1} parent=1 // pred_fallthru
      _
    // Predicated region
    $region10: #{tpu_custom_call.1} parent=1 // pred_check
      _
    $region11: #{tpu_custom_call.1} parent=1 // pred_check_branch
      %33 = sbr.rel (0) target = $region13
    $region12: #{tpu_custom_call.1} parent=1 // pred_region
      %s35 = ssub.s32 2048, 2048
      %36 = vsyncadd [#allocation6], %s35
      %s37 = sshll.u32 [#allocation7], 4
      %s38 = int_to_ptr.vmem [resolvable:$true] %s37
      %43 = dma.hbm_to_vmem [thread:$0]  %s2, 2048, %s38, [#allocation6], 128, 128, 8
    $region13: #{tpu_custom_call.1} parent=1 // pred_fallthru
      _
    // Predicated region
    $region14: #{tpu_custom_call.1} parent=1 // pred_check
      _
    $region15: #{tpu_custom_call.1} parent=1 // pred_check_branch
      %45 = sbr.rel (0) target = $region17
    $region16: #{tpu_custom_call.1} parent=1 // pred_region
      _
    $region17: #{tpu_custom_call.1} parent=1 // pred_fallthru
      _
    // Predicated region
    $region18: #{tpu_custom_call.1} parent=1 // pred_check
      _
    $region19: #{tpu_custom_call.1} parent=1 // pred_check_branch
      %47 = sbr.rel (0) target = $region21
    $region20: #{tpu_custom_call.1} parent=1 // pred_region
      %48 = dma.done [#allocation3], 128
    $region21: #{tpu_custom_call.1} parent=1 // pred_fallthru
      _
    // Predicated region
    $region22: #{tpu_custom_call.1} parent=1 // pred_check
      _
    $region23: #{tpu_custom_call.1} parent=1 // pred_check_branch
      %50 = sbr.rel (0) target = $region25
    $region24: #{tpu_custom_call.1} parent=1 // pred_region
      %51 = dma.done [#allocation6], 128
    $region25: #{tpu_custom_call.1} parent=1 // pred_fallthru
      _
    // Predicated region
    $region26: #{tpu_custom_call.1} parent=1 // pred_check
      _
    $region27: #{tpu_custom_call.1} parent=1 // pred_check_branch
      %53 = sbr.rel (0) target = $region29
    $region28: #{tpu_custom_call.1} parent=1 // pred_region
      %54 = dma.done [#allocation6], 2048
    $region29: #{tpu_custom_call.1} parent=1 // pred_fallthru
      _
    %v55 = vld [vmem:[#allocation2] sm:$0xff]
    %v56 = vld [vmem:[#allocation5] sm:$0xff]
    %v57 = vld [vmem:[%s3] sm:$0x1]
    %v58 = vld [vmem:[%s3 + $0x1] sm:$0x1]
    %v59 = vld [vmem:[%s3 + $0x2] sm:$0x1]
    %v60 = vld [vmem:[#allocation7] sm:$0xff]
    %v61 = vld [vmem:[#allocation7 + $0x8] sm:$0xff]
    %v62 = vld [vmem:[#allocation7 + $0x10] sm:$0xff]
    %v63 = vld [vmem:[#allocation7 + $0x18] sm:$0xff]
    %v64 = vld [vmem:[#allocation7 + $0x20] sm:$0xff]
    %v65 = vld [vmem:[#allocation7 + $0x28] sm:$0xff]
    %v66 = vld [vmem:[#allocation7 + $0x30] sm:$0xff]
    %v67 = vld [vmem:[#allocation7 + $0x38] sm:$0xff]
    %v68 = vld [vmem:[#allocation7 + $0x40] sm:$0xff]
    %v69 = vld [vmem:[#allocation7 + $0x48] sm:$0xff]
    %v70 = vld [vmem:[#allocation7 + $0x50] sm:$0xff]
    %v71 = vld [vmem:[#allocation7 + $0x58] sm:$0xff]
    %v72 = vld [vmem:[#allocation7 + $0x60] sm:$0xff]
    %v73 = vld [vmem:[#allocation7 + $0x68] sm:$0xff]
    %v74 = vld [vmem:[#allocation7 + $0x70] sm:$0xff]
    %v75 = vld [vmem:[#allocation7 + $0x78] sm:$0xff]
    %v76 = vlaneseq
    %v77 = vshrl.u32 %v76, 7
    %v78 = vsub.s32 0, %v77
    %v79 = vrot.slane %v57, %v78
    %80 = vmatprep.subr.mxu0 0.0
    %81 = vmatpush1.msra.mxu0 %v60
    %82 = vmatprep.subr.mxu0 0.0
    %83 = vmatpush1.msra.mxu0 %v61
    %84 = vmatprep.subr.mxu0 0.0
    %85 = vmatpush1.msra.mxu0 %v62
    %86 = vmatprep.subr.mxu0 0.0
    %87 = vmatpush1.msra.mxu0 %v63
    %88 = vmatprep.subr.mxu0 0.0
    %89 = vmatpush1.msra.mxu0 %v64
    %90 = vmatprep.subr.mxu0 0.0
    %91 = vmatpush1.msra.mxu0 %v65
    %92 = vmatprep.subr.mxu0 0.0
    %93 = vmatpush1.msra.mxu0 %v66
    %94 = vmatprep.subr.mxu0 0.0
    %95 = vmatpush1.msra.mxu0 %v67
    %96 = vmatprep.subr.mxu0 0.0
    %97 = vmatpush1.msra.mxu0 %v68
    %98 = vmatprep.subr.mxu0 0.0
    %99 = vmatpush1.msra.mxu0 %v69
    %100 = vmatprep.subr.mxu0 0.0
    %101 = vmatpush1.msra.mxu0 %v70
    %102 = vmatprep.subr.mxu0 0.0
    %103 = vmatpush1.msra.mxu0 %v71
    %104 = vmatprep.subr.mxu0 0.0
    %105 = vmatpush1.msra.mxu0 %v72
    %106 = vmatprep.subr.mxu0 0.0
    %107 = vmatpush1.msra.mxu0 %v73
    %108 = vmatprep.subr.mxu0 0.0
    %109 = vmatpush1.msra.mxu0 %v74
    %110 = vmatprep.subr.mxu0 0.0
    %111 = vmatpush1.msra.mxu0 %v75
    %112 = vmatprep.subr.mxu0 0.0
    %113 = vmatpush1.msra.mxu0 0.0
    %114 = vmatprep.subr.mxu0 0.0
    %115 = vmatpush1.msra.mxu0 0.0
    %116 = vmatprep.subr.mxu0 0.0
    %117 = vmatpush1.msra.mxu0 0.0
    %118 = vmatprep.subr.mxu0 0.0
    %119 = vmatpush1.msra.mxu0 0.0
    %120 = vmatprep.subr.mxu0 0.0
    %121 = vmatpush1.msra.mxu0 0.0
    %122 = vmatprep.subr.mxu0 0.0
    %123 = vmatpush1.msra.mxu0 0.0
    %124 = vmatprep.subr.mxu0 0.0
    %125 = vmatpush1.msra.mxu0 0.0
    %126 = vmatprep.subr.mxu0 0.0
    %127 = vmatpush1.msra.mxu0 0.0
    %128 = vmatprep.subr.mxu0 0.0
    %129 = vmatpush1.msra.mxu0 0.0
    %130 = vmatprep.subr.mxu0 0.0
    %131 = vmatpush1.msra.mxu0 0.0
    %132 = vmatprep.subr.mxu0 0.0
    %133 = vmatpush1.msra.mxu0 0.0
    %134 = vmatprep.subr.mxu0 0.0
    %135 = vmatpush1.msra.mxu0 0.0
    %136 = vmatprep.subr.mxu0 0.0
    %137 = vmatpush1.msra.mxu0 0.0
    %138 = vmatprep.subr.mxu0 0.0
    %139 = vmatpush1.msra.mxu0 0.0
    %140 = vmatprep.subr.mxu0 0.0
    %141 = vmatpush1.msra.mxu0 0.0
    %142 = vmatprep.subr.mxu0 0.0
    %143 = vmatpush1.msra.mxu0 0.0
    %144 = vmatprep.mubr.f32.mxu0 0.0
    %145 = vmatmul.mubr.f32.gmra.mrb[0].mxu0 %v56
    %v146 = vpop.f32.mrb[0].mxu0
    %v147 = vadd.f32 %v79, %v146
    %v148 = vpop.f32.mrb[0].mxu0
    %149 = vdwg.mxu0
    %v150 = vadd.f32 %v147, %v55
    %151 = vadd.xlane.f32.xlu0 %v150
    %v152 = vpop.xlane.xlu0 %151
    %v153 = vmul.f32 %v152, 0.03125
    %v154 = vsub.f32 %v150, %v153
    %v155 = vlaneseq
    %v156 = vand.u32 %v155, 127
    %vm157 = vcmp.lt.s32.totalorder %v156, 32
    %v158 = vsel %vm157, %v154, 0.0
    %v159 = vmul.f32 %v158, %v158
    %160 = vadd.xlane.f32.xlu0 %v159
    %v161 = vpop.xlane.xlu0 %160
    %v162 = vmul.f32 %v161, 0.03125
    %v163 = vadd.f32 %v162, 1e-05
    %v164 = vrsqrt.pop %v163
    %v165 = vmul.f32 %v154, %v164
    %v166 = vlaneseq
    %v167 = vshrl.u32 %v166, 7
    %v168 = vsub.s32 0, %v167
    %v169 = vrot.slane %v58, %v168
    %v170 = vmul.f32 %v165, %v169
    %v171 = vlaneseq
    %v172 = vshrl.u32 %v171, 7
    %v173 = vsub.s32 0, %v172
    %v174 = vrot.slane %v59, %v173
    %v175 = vadd.f32 %v170, %v174
    %176 = vst [vmem:[#allocation8] sm:$0xff] %v175
    // Predicated region
    $region30: #{tpu_custom_call.1} parent=1 // pred_check
      _
    $region31: #{tpu_custom_call.1} parent=1 // pred_check_branch
      %178 = sbr.rel (0) target = $region33
    $region32: #{tpu_custom_call.1} parent=1 // pred_region
      %s180 = ssub.s32 128, 128
      %181 = vsyncadd [#allocation4], %s180
      %s183 = sshll.u32 [#allocation8], 4
      %s184 = int_to_ptr.vmem [resolvable:$true] %s183
      %186 = dma.vmem_to_hbm [thread:$0]  %s184, 128, %s4, [#allocation4]
    $region33: #{tpu_custom_call.1} parent=1 // pred_fallthru
      _
    // Predicated region
    $region34: #{tpu_custom_call.1} parent=1 // pred_check
      _
    $region35: #{tpu_custom_call.1} parent=1 // pred_check_branch
      %188 = sbr.rel (0) target = $region37
    $region36: #{tpu_custom_call.1} parent=1 // pred_region
      %189 = dma.done [#allocation4], 128
    $region37: #{tpu_custom_call.1} parent=1 // pred_fallthru
      _
    %190 = vsyncpa [#allocation3], 1
    %191 = vsyncpa [#allocation6], 1
    %192 = vsyncpa [#allocation4], 1

</llo_original>
